<compile_context>
chip_gen: v6e
topology: v6e:2x2x1
jax: 0.10.0
libtpu: 0.0.40
codegen_flags: <defaults>
</compile_context>

<pallas_src>
import math
import functools

import jax
import jax.numpy as jnp
from jax import lax
from jax.experimental import pallas as pl
from jax.experimental.pallas import tpu as pltpu


def _round_up(x, m):
    return ((x + m - 1) // m) * m


def _cdiv(a, b):
    return -(-a // b)


def _balanced_tile(dim, max_tile, align):
    """Largest tile <= max_tile (aligned) that splits `dim` into balanced blocks."""
    max_tile = max(align, _round_up(max_tile, align))
    nblocks = max(1, _cdiv(dim, max_tile))
    tile = _round_up(_cdiv(dim, nblocks), align)
    return min(tile, _round_up(dim, align))


def _equal_linear_kernel(*refs, weight_scale, activate, negative_slope,
                         act_scale, has_bias, acc_in_out):
    if has_bias:
        x_ref, w_ref, b_ref, o_ref = refs[:4]
        rest = refs[4:]
    else:
        x_ref, w_ref, o_ref = refs[:3]
        b_ref = None
        rest = refs[3:]
    acc_ref = o_ref if acc_in_out else rest[0]

    k = pl.program_id(2)

    # (tm, tk) . (tk, tn) -> (tm, tn): canonical MXU feed, f32 accumulation.
    partial = lax.dot_general(
        x_ref[...], w_ref[...],
        dimension_numbers=(((1,), (0,)), ((), ())),
        preferred_element_type=jnp.float32)

    @pl.when(k == 0)
    def _assign():
        acc_ref[...] = partial.astype(acc_ref.dtype)

    @pl.when(k > 0)
    def _accumulate():
        acc_ref[...] += partial.astype(acc_ref.dtype)

    @pl.when(k == pl.num_programs(2) - 1)
    def _finalize():
        out = acc_ref[...].astype(jnp.float32) * weight_scale
        if has_bias:
            out = out + b_ref[...].astype(jnp.float32)       # (1, tn) broadcast
        if activate:
            # act_scale folded into both branches of the select (constants fold).
            out = jnp.where(out >= 0.0,
                            out * act_scale,
                            out * (negative_slope * act_scale))
        o_ref[...] = out.astype(o_ref.dtype)


def equal_linear_forward(x, weight, bias=None, *, lr_mul=1.0, activate=False,
                         negative_slope=0.2, act_scale=math.sqrt(2.0),
                         block_m=512, block_n=512, block_k=1024,
                         compute_dtype=None, weight_is_transposed=False,
                         weight_buffering=None):
    """Pallas EqualLinear forward.

    x: (M, K); weight: (N, K) (PyTorch layout) or (K, N) if weight_is_transposed;
    bias: (N,) or None.  Returns (M, N) in x's dtype.
    """
    M, K = x.shape
    if weight_is_transposed:
        Kw, N = weight.shape
    else:
        N, Kw = weight.shape
    assert K == Kw, (K, Kw)

    out_dtype = x.dtype
    weight_scale = (1.0 / math.sqrt(K)) * lr_mul
    has_bias = bias is not None

    # Canonical (K, N) weight layout for the MXU.  For a persistent layer weight
    # this transpose is a one-time wrapper cost (or free if stored transposed).
    w_t = weight if weight_is_transposed else weight.T
    if compute_dtype is not None:
        x = x.astype(compute_dtype)
        w_t = w_t.astype(compute_dtype)

    # Balanced tiles: minimal padding waste, (8, 128)-aligned.
    tm = _balanced_tile(M, block_m, 8)
    tn = _balanced_tile(N, block_n, 128)
    tk = _balanced_tile(K, block_k, 128)

    # v7x megacore: with a single M block (the typical small-batch case) make sure
    # the N ("parallel") axis has >= 2 blocks so both TensorCores are busy.
    if _cdiv(M, tm) == 1 and _cdiv(N, tn) == 1 and N > 128:
        tn = _round_up(_cdiv(N, 2), 128)

    # Only K needs explicit zero padding (padded columns contribute 0 to the dot).
    # Ragged M / N edges are handled by Pallas' masked out-of-bounds block writes.
    Kp = _round_up(K, tk)
    if Kp != K:
        x = jnp.pad(x, ((0, 0), (0, Kp - K)))
        w_t = jnp.pad(w_t, ((0, Kp - K), (0, 0)))

    grid = (_cdiv(M, tm), _cdiv(N, tn), Kp // tk)

    # When the output dtype is f32, accumulate directly into the resident output
    # block and drop the separate f32 scratch.
    acc_in_out = (jnp.dtype(out_dtype) == jnp.dtype(jnp.float32))

    w_spec_kwargs = {}
    if weight_buffering is not None and weight_buffering != 2:
        w_spec_kwargs["pipeline_mode"] = pl.Buffered(weight_buffering)

    in_specs = [
        pl.BlockSpec((tm, tk), lambda i, j, k: (i, k)),                   # x tile
        pl.BlockSpec((tk, tn), lambda i, j, k: (k, j), **w_spec_kwargs),  # W tile (K,N)
    ]
    inputs = [x, w_t]
    if has_bias:
        b = (bias.astype(jnp.float32) * lr_mul).reshape(1, N)   # fold lr_mul, lane-dense
        in_specs.append(pl.BlockSpec((1, tn), lambda i, j, k: (0, j)))
        inputs.append(b)

    scratch_shapes = [] if acc_in_out else [pltpu.VMEM((tm, tn), jnp.float32)]

    kernel = functools.partial(
        _equal_linear_kernel,
        weight_scale=weight_scale,
        activate=activate,
        negative_slope=negative_slope,
        act_scale=act_scale,
        has_bias=has_bias,
        acc_in_out=acc_in_out,
    )

    in_item = jnp.dtype(x.dtype).itemsize
    out_item = jnp.dtype(out_dtype).itemsize
    vmem_needed = (2 * (tm * tk + tk * tn) * in_item          # double-buffered x / W tiles
                   + 2 * tm * tn * out_item                   # double-buffered out tile
                   + (0 if acc_in_out else tm * tn * 4)       # f32 accumulator scratch
                   + (2 * tn * 4 if has_bias else 0))
    # Generation-aware ceiling: ~112 MiB on v5e/v6e (128 MiB VMEM), ~56 MiB on v7x.
    try:
        vmem_cap = int(pltpu.get_tpu_info().vmem_capacity_bytes)
    except Exception:
        vmem_cap = 64 * 1024 * 1024
    vmem_cap = (vmem_cap * 7) // 8
    vmem_limit = int(min(max(2 * vmem_needed, 32 * 1024 * 1024), vmem_cap))

    gm, gn, gk = grid
    cost = pl.CostEstimate(
        flops=2 * (gm * tm) * (gn * tn) * Kp,
        transcendentals=0,
        bytes_accessed=(gn * M * Kp * in_item            # x re-read once per N block
                        + gm * Kp * N * in_item          # W re-read once per M block
                        + M * N * out_item
                        + (N * 4 if has_bias else 0)),
    )

    return pl.pallas_call(
        kernel,
        out_shape=jax.ShapeDtypeStruct((M, N), out_dtype),
        grid_spec=pltpu.PrefetchScalarGridSpec(
            num_scalar_prefetch=0,
            grid=grid,
            in_specs=in_specs,
            out_specs=pl.BlockSpec((tm, tn), lambda i, j, k: (i, j)),
            scratch_shapes=scratch_shapes,
        ),
        compiler_params=pltpu.CompilerParams(
            dimension_semantics=("parallel", "parallel", "arbitrary"),
            vmem_limit_bytes=vmem_limit,
        ),
        cost_estimate=cost,
    )(*inputs)


def reference_equal_linear(x, weight, bias, *, lr_mul=1.0, activate=False):
    """Pure-JAX reference mirroring the PyTorch module."""
    x = x.astype(jnp.float32)
    weight = weight.astype(jnp.float32)
    scale = (1.0 / math.sqrt(x.shape[-1])) * lr_mul
    out = x @ (weight * scale).T
    if bias is not None:
        out = out + bias.astype(jnp.float32) * lr_mul
    if activate:
        out = jnp.where(out >= 0.0, out, out * 0.2) * math.sqrt(2.0)
    return out


def _check(got, want, atol, rtol, msg):
    got = jnp.asarray(got, jnp.float32)
    want = jnp.asarray(want, jnp.float32)
    assert jnp.allclose(got, want, atol=atol, rtol=rtol), msg


if __name__ == "__main__":
    key = jax.random.PRNGKey(0)
    k_w, k_x, k_w2, k_x2, k_w3, k_x3, k_b3 = jax.random.split(key, 7)

    # Case 1: small aligned shapes with bias, both activation branches, lr_mul != 1.
    batch, in_channel, out_channel = 8, 32, 32
    lr_mul, bias_init = 0.5, 0.1
    weight = jax.random.normal(k_w, (out_channel, in_channel), jnp.float32) / lr_mul
    bias = jnp.full((out_channel,), bias_init, dtype=jnp.float32)
    x = jax.random.normal(k_x, (batch, in_channel), jnp.float32)

    out_plain = jax.block_until_ready(
        equal_linear_forward(x, weight, bias, lr_mul=lr_mul, activate=False))
    out_act = jax.block_until_ready(
        equal_linear_forward(x, weight, bias, lr_mul=lr_mul, activate=True))
    _check(out_plain, reference_equal_linear(x, weight, bias, lr_mul=lr_mul, activate=False),
           1e-4, 1e-4, "plain mismatch")
    _check(out_act, reference_equal_linear(x, weight, bias, lr_mul=lr_mul, activate=True),
           1e-4, 1e-4, "activate mismatch")

    # Case 2: non-aligned (ragged M/N/K) shapes and bias=None (exercises OOB masking).
    M2, K2, N2 = 10, 48, 40
    weight2 = jax.random.normal(k_w2, (N2, K2), jnp.float32)
    x2 = jax.random.normal(k_x2, (M2, K2), jnp.float32)
    out2 = jax.block_until_ready(
        equal_linear_forward(x2, weight2, None, lr_mul=1.0, activate=True))
    _check(out2, reference_equal_linear(x2, weight2, None, lr_mul=1.0, activate=True),
           1e-4, 1e-4, "ragged/no-bias mismatch")

    # Case 3: multi-step K accumulation + N split into >=2 parallel blocks (v7x path).
    M3, K3, N3 = 4, 256, 384
    weight3 = jax.random.normal(k_w3, (N3, K3), jnp.float32)
    bias3 = jax.random.normal(k_b3, (N3,), jnp.float32) * 0.1
    x3 = jax.random.normal(k_x3, (M3, K3), jnp.float32)
    out3 = jax.block_until_ready(
        equal_linear_forward(x3, weight3, bias3, lr_mul=1.0, activate=True, block_k=128))
    _check(out3, reference_equal_linear(x3, weight3, bias3, lr_mul=1.0, activate=True),
           2e-2, 2e-2, "multi-K / split-N mismatch")

    # Case 4: bf16 compute path (f32 in/out, bf16 operands into the MXU).
    out4 = jax.block_until_ready(
        equal_linear_forward(x, weight, bias, lr_mul=lr_mul, activate=True,
                             compute_dtype=jnp.bfloat16))
    _check(out4, reference_equal_linear(x, weight, bias, lr_mul=lr_mul, activate=True),
           3e-2, 3e-2, "bf16 compute mismatch")

    # Case 5: bf16 inputs/outputs (exercises the f32 scratch-accumulator path).
    out5 = jax.block_until_ready(
        equal_linear_forward(x.astype(jnp.bfloat16), weight.astype(jnp.bfloat16),
                             bias, lr_mul=lr_mul, activate=True))
    _check(out5, reference_equal_linear(x, weight, bias, lr_mul=lr_mul, activate=True),
           5e-2, 5e-2, "bf16 output mismatch")

    print("KERNEL_OK")
</pallas_src>

<mosaic_0001>
module attributes {stable_mosaic.version = 11 : i64} {
  func.func @_equal_linear_kernel(%arg0: i32, %arg1: i32, %arg2: i32, %arg3: memref<8x128xf32, #tpu.memory_space<vmem>>, %arg4: memref<128x128xf32, #tpu.memory_space<vmem>>, %arg5: memref<1x128xf32, #tpu.memory_space<vmem>>, %arg6: memref<8x128xf32, #tpu.memory_space<vmem>>) attributes {dimension_semantics = [#tpu.dimension_semantics<parallel>, #tpu.dimension_semantics<parallel>, #tpu.dimension_semantics<arbitrary>], iteration_bounds = array<i64: 1, 1, 1>, scalar_prefetch = 0 : i64, scratch_operands = 0 : i64, tpu.core_type = #tpu.core_type<tc>, window_params = [{transform_indices = @transform_0, window_bounds = array<i64: 8, 128>}, {transform_indices = @transform_1, window_bounds = array<i64: 128, 128>}, {transform_indices = @transform_2, window_bounds = array<i64: 1, 128>}, {transform_indices = @transform_3, window_bounds = array<i64: 8, 128>}]} {
    %c0 = arith.constant 0 : index
    %c0_0 = arith.constant 0 : index
    %0 = vector.load %arg3[%c0, %c0_0] : memref<8x128xf32, #tpu.memory_space<vmem>>, vector<8x128xf32>
    %c0_1 = arith.constant 0 : index
    %c0_2 = arith.constant 0 : index
    %1 = vector.load %arg4[%c0_1, %c0_2] : memref<128x128xf32, #tpu.memory_space<vmem>>, vector<128x128xf32>
    %cst = arith.constant dense<0.000000e+00> : vector<8x128xf32>
    %2 = tpu.matmul %0, %1, %cst {dimension_numbers = #tpu.dot_dimension_numbers<[1], [0], [0], [1], [0, 0, 1, 1], [], []>} : vector<8x128xf32>, vector<128x128xf32>, vector<8x128xf32> -> vector<8x128xf32>
    %c0_i32 = arith.constant 0 : i32
    %3 = arith.cmpi eq, %arg2, %c0_i32 : i32
    %4 = arith.extui %3 : i1 to i32
    %c0_i32_3 = arith.constant 0 : i32
    %5 = arith.cmpi ne, %4, %c0_i32_3 : i32
    scf.if %5 {
      %c0_8 = arith.constant 0 : index
      %c0_9 = arith.constant 0 : index
      %12 = vector.load %arg6[%c0_8, %c0_9] : memref<8x128xf32, #tpu.memory_space<vmem>>, vector<8x128xf32>
      tpu.vector_store %arg6[%c0_8, %c0_9], %2 {strides = array<i32>} : memref<8x128xf32, #tpu.memory_space<vmem>>, vector<8x128xf32>,
    } else {
    }
    %c0_i32_4 = arith.constant 0 : i32
    %6 = arith.cmpi sgt, %arg2, %c0_i32_4 : i32
    %7 = arith.extui %6 : i1 to i32
    %c0_i32_5 = arith.constant 0 : i32
    %8 = arith.cmpi ne, %7, %c0_i32_5 : i32
    scf.if %8 {
      %c0_8 = arith.constant 0 : index
      %c0_9 = arith.constant 0 : index
      %12 = vector.load %arg6[%c0_8, %c0_9] : memref<8x128xf32, #tpu.memory_space<vmem>>, vector<8x128xf32>
      %13 = arith.addf %12, %2 : vector<8x128xf32>
      %c0_10 = arith.constant 0 : index
      %c0_11 = arith.constant 0 : index
      %14 = vector.load %arg6[%c0_10, %c0_11] : memref<8x128xf32, #tpu.memory_space<vmem>>, vector<8x128xf32>
      tpu.vector_store %arg6[%c0_10, %c0_11], %13 {strides = array<i32>} : memref<8x128xf32, #tpu.memory_space<vmem>>, vector<8x128xf32>,
    } else {
    }
    %c0_i32_6 = arith.constant 0 : i32
    %9 = arith.cmpi eq, %arg2, %c0_i32_6 : i32
    %10 = arith.extui %9 : i1 to i32
    %c0_i32_7 = arith.constant 0 : i32
    %11 = arith.cmpi ne, %10, %c0_i32_7 : i32
    scf.if %11 {
      %c0_8 = arith.constant 0 : index
      %c0_9 = arith.constant 0 : index
      %12 = vector.load %arg6[%c0_8, %c0_9] : memref<8x128xf32, #tpu.memory_space<vmem>>, vector<8x128xf32>
      %cst_10 = arith.constant 0.0883883461 : f32
      %13 = vector.broadcast %cst_10 : f32 to vector<8x128xf32>
      %14 = arith.mulf %12, %13 : vector<8x128xf32>
      %c0_11 = arith.constant 0 : index
      %c0_12 = arith.constant 0 : index
      %15 = vector.load %arg5[%c0_11, %c0_12] : memref<1x128xf32, #tpu.memory_space<vmem>>, vector<1x128xf32>
      %16 = vector.broadcast %15 : vector<1x128xf32> to vector<8x128xf32>
      %17 = arith.addf %14, %16 : vector<8x128xf32>
      %c0_13 = arith.constant 0 : index
      %c0_14 = arith.constant 0 : index
      %18 = vector.load %arg6[%c0_13, %c0_14] : memref<8x128xf32, #tpu.memory_space<vmem>>, vector<8x128xf32>
      tpu.vector_store %arg6[%c0_13, %c0_14], %17 {strides = array<i32>} : memref<8x128xf32, #tpu.memory_space<vmem>>, vector<8x128xf32>,
    } else {
    }
    return
  }
  func.func @transform_0(%arg0: i32, %arg1: i32, %arg2: i32) -> (i32, i32) {
    %c0_i32 = arith.constant 0 : i32
    return %arg0, %arg2 : i32, i32
  }
  func.func @transform_1(%arg0: i32, %arg1: i32, %arg2: i32) -> (i32, i32) {
    %c0_i32 = arith.constant 0 : i32
    return %arg2, %arg1 : i32, i32
  }
  func.func @transform_2(%arg0: i32, %arg1: i32, %arg2: i32) -> (i32, i32) {
    %c0_i32 = arith.constant 0 : i32
    %c0_i32_0 = arith.constant 0 : i32
    return %c0_i32, %arg1 : i32, i32
  }
  func.func @transform_3(%arg0: i32, %arg1: i32, %arg2: i32) -> (i32, i32) {
    %c0_i32 = arith.constant 0 : i32
    return %arg0, %arg1 : i32, i32
  }
}

</mosaic_0001>

<llo_original>
// kernel: tpu_custom_call.1
$region0: #{tpu_custom_call.1}
  #allocation0 [shape = 'u32[]', space=smem, size = 0x4, offset = 0x4, fixed_abs, tag = 'smem constant byte address 0x4 - core index']
  #allocation1 [shape = 'u32[144,128]{1,0:T(1,128)}', space=vmem, size = 0x12000, scoped, tag = 'internal scratch']
  %s0 = inlined_call_operand.vmem [shape: f32[8,128], index: 0, kind: input, shape index: {}]
  %s1 = inlined_call_operand.vmem [shape: f32[128,32], index: 1, kind: input, shape index: {}]
  %s2 = inlined_call_operand.vmem [shape: f32[1,32], index: 2, kind: input, shape index: {}]
  %s3 = inlined_call_operand.hbm [shape: f32[8,32], index: 3, kind: output, shape index: {}]
  %s4 = sld [smem:[#allocation0]]
  $region34: #{tpu_custom_call.1} parent=0
    _
  %s6 = ssub.s32 1, %s4
  %s7 = scalar_select 0, %s6, %s4
  $region1: #{tpu_custom_call.1} parent=0
    #allocation2 [shape = 'u8[4096]{0}', space=vmem, size = 0x1000, scoped, tag = 'output window, operand 0, single buffered']
    #allocation3 [shape = 's32[1]{0}', space=sflag, size = 0x4, scoped, tag = 'scoped memory for tpu_custom_call.1']
    %8 = vsyncpa [#allocation3], 0
    // Predicated region
    $region2: #{tpu_custom_call.1} parent=1 // pred_check
      _
    $region3: #{tpu_custom_call.1} parent=1 // pred_check_branch
      %10 = sbr.rel (0) target = $region5
    $region4: #{tpu_custom_call.1} parent=1 // pred_region
      _
    $region5: #{tpu_custom_call.1} parent=1 // pred_fallthru
      _
    // Predicated region
    $region6: #{tpu_custom_call.1} parent=1 // pred_check
      _
    $region7: #{tpu_custom_call.1} parent=1 // pred_check_branch
      %12 = sbr.rel (0) target = $region9
    $region8: #{tpu_custom_call.1} parent=1 // pred_region
      _
    $region9: #{tpu_custom_call.1} parent=1 // pred_fallthru
      _
    // Predicated region
    $region10: #{tpu_custom_call.1} parent=1 // pred_check
      _
    $region11: #{tpu_custom_call.1} parent=1 // pred_check_branch
      %14 = sbr.rel (0) target = $region13
    $region12: #{tpu_custom_call.1} parent=1 // pred_region
      _
    $region13: #{tpu_custom_call.1} parent=1 // pred_fallthru
      _
    %v15 = vld [vmem:[%s0] sm:$0xff]
    %v16 = vld [vmem:[%s1] sm:$0xff]
    %v17 = vld [vmem:[%s1 + $0x8] sm:$0xff]
    %v18 = vld [vmem:[%s1 + $0x10] sm:$0xff]
    %v19 = vld [vmem:[%s1 + $0x18] sm:$0xff]
    %v20 = vld [vmem:[%s1 + $0x20] sm:$0xff]
    %v21 = vld [vmem:[%s1 + $0x28] sm:$0xff]
    %v22 = vld [vmem:[%s1 + $0x30] sm:$0xff]
    %v23 = vld [vmem:[%s1 + $0x38] sm:$0xff]
    %v24 = vld [vmem:[%s1 + $0x40] sm:$0xff]
    %v25 = vld [vmem:[%s1 + $0x48] sm:$0xff]
    %v26 = vld [vmem:[%s1 + $0x50] sm:$0xff]
    %v27 = vld [vmem:[%s1 + $0x58] sm:$0xff]
    %v28 = vld [vmem:[%s1 + $0x60] sm:$0xff]
    %v29 = vld [vmem:[%s1 + $0x68] sm:$0xff]
    %v30 = vld [vmem:[%s1 + $0x70] sm:$0xff]
    %v31 = vld [vmem:[%s1 + $0x78] sm:$0xff]
    %32 = vmatprep.subr.mxu0 0.0
    %33 = vmatpush1.msra.mxu0 %v31
    %34 = vmatprep.subr.mxu0 0.0
    %35 = vmatpush1.msra.mxu0 %v30
    %36 = vmatprep.subr.mxu0 0.0
    %37 = vmatpush1.msra.mxu0 %v29
    %38 = vmatprep.subr.mxu0 0.0
    %39 = vmatpush1.msra.mxu0 %v28
    %40 = vmatprep.subr.mxu0 0.0
    %41 = vmatpush1.msra.mxu0 %v27
    %42 = vmatprep.subr.mxu0 0.0
    %43 = vmatpush1.msra.mxu0 %v26
    %44 = vmatprep.subr.mxu0 0.0
    %45 = vmatpush1.msra.mxu0 %v25
    %46 = vmatprep.subr.mxu0 0.0
    %47 = vmatpush1.msra.mxu0 %v24
    %48 = vmatprep.subr.mxu0 0.0
    %49 = vmatpush1.msra.mxu0 %v23
    %50 = vmatprep.subr.mxu0 0.0
    %51 = vmatpush1.msra.mxu0 %v22
    %52 = vmatprep.subr.mxu0 0.0
    %53 = vmatpush1.msra.mxu0 %v21
    %54 = vmatprep.subr.mxu0 0.0
    %55 = vmatpush1.msra.mxu0 %v20
    %56 = vmatprep.subr.mxu0 0.0
    %57 = vmatpush1.msra.mxu0 %v19
    %58 = vmatprep.subr.mxu0 0.0
    %59 = vmatpush1.msra.mxu0 %v18
    %60 = vmatprep.subr.mxu0 0.0
    %61 = vmatpush1.msra.mxu0 %v17
    %62 = vmatprep.subr.mxu0 0.0
    %63 = vmatpush1.msra.mxu0 %v16
    %64 = vmatprep.subr.mxu0 0.0
    %65 = vmatpush2.msra.mxu0 0.0
    %66 = vmatprep.subr.mxu0 0.0
    %67 = vmatpush2.msra.mxu0 0.0
    %68 = vmatprep.subr.mxu0 0.0
    %69 = vmatpush2.msra.mxu0 0.0
    %70 = vmatprep.subr.mxu0 0.0
    %71 = vmatpush2.msra.mxu0 0.0
    %72 = vmatprep.subr.mxu0 0.0
    %73 = vmatpush2.msra.mxu0 0.0
    %74 = vmatprep.subr.mxu0 0.0
    %75 = vmatpush2.msra.mxu0 0.0
    %76 = vmatprep.subr.mxu0 0.0
    %77 = vmatpush2.msra.mxu0 0.0
    %78 = vmatprep.subr.mxu0 0.0
    %79 = vmatpush2.msra.mxu0 0.0
    %80 = vmatprep.subr.mxu0 0.0
    %81 = vmatpush2.msra.mxu0 0.0
    %82 = vmatprep.subr.mxu0 0.0
    %83 = vmatpush2.msra.mxu0 0.0
    %84 = vmatprep.subr.mxu0 0.0
    %85 = vmatpush2.msra.mxu0 0.0
    %86 = vmatprep.subr.mxu0 0.0
    %87 = vmatpush2.msra.mxu0 0.0
    %88 = vmatprep.subr.mxu0 0.0
    %89 = vmatpush2.msra.mxu0 0.0
    %90 = vmatprep.subr.mxu0 0.0
    %91 = vmatpush2.msra.mxu0 0.0
    %92 = vmatprep.subr.mxu0 0.0
    %93 = vmatpush2.msra.mxu0 0.0
    %94 = vmatprep.subr.mxu0 0.0
    %95 = vmatpush2.msra.mxu0 0.0
    %96 = vmatprep.mubr.f32.mxu0 0.0
    %97 = vmatmul.mubr.f32.gmra.mxu0 %v15
    %v98 = vpop.f32.mrf.mxu0
    %v99 = vadd.f32 0.0, %v98
    %v100 = vpop.f32.mrf.mxu0
    %101 = vdwg.mxu0
    %p102 = scmp.eq.s32.totalorder 0, 0
    // Predicated region
    $region14: #{tpu_custom_call.1} parent=1 // pred_check
      %p103 = pneg %p102
    $region15: #{tpu_custom_call.1} parent=1 // pred_check_branch
      %105 = sbr.rel (%p103) target = $region17
    $region16: #{tpu_custom_call.1} parent=1 // pred_region
      %106 = vst [vmem:[#allocation2] sm:$0xff] %v99
    $region17: #{tpu_custom_call.1} parent=1 // pred_fallthru
      _
    %p107 = scmp.gt.s32.totalorder 0, 0
    // Predicated region
    $region18: #{tpu_custom_call.1} parent=1 // pred_check
      %p108 = pneg %p107
    $region19: #{tpu_custom_call.1} parent=1 // pred_check_branch
      %110 = sbr.rel (%p108) target = $region21
    $region20: #{tpu_custom_call.1} parent=1 // pred_region
      %v111 = vld [vmem:[#allocation2] sm:$0xff]
      %v112 = vadd.f32 %v111, %v99
      %113 = vst [vmem:[#allocation2] sm:$0xff] %v112
    $region21: #{tpu_custom_call.1} parent=1 // pred_fallthru
      _
    // Predicated region
    $region22: #{tpu_custom_call.1} parent=1 // pred_check
      %p114 = pneg %p102
    $region23: #{tpu_custom_call.1} parent=1 // pred_check_branch
      %116 = sbr.rel (%p114) target = $region25
    $region24: #{tpu_custom_call.1} parent=1 // pred_region
      %v117 = vld [vmem:[#allocation2] sm:$0xff]
      %v118 = vmul.f32 %v117, 0.088388346
      %v119 = vld [vmem:[%s2] sm:$0x1]
      %v121 = vlaneseq
      %v122 = vshrl.u32 %v121, 7
      %v123 = vsub.s32 0, %v122
      %v124 = vrot.slane %v119, %v123
      %v126 = vadd.f32 %v118, %v124
      %127 = vst [vmem:[#allocation2] sm:$0xff] %v126
    $region25: #{tpu_custom_call.1} parent=1 // pred_fallthru
      _
    // Predicated region
    $region26: #{tpu_custom_call.1} parent=1 // pred_check
      _
    $region27: #{tpu_custom_call.1} parent=1 // pred_check_branch
      %129 = sbr.rel (0) target = $region29
    $region28: #{tpu_custom_call.1} parent=1 // pred_region
      %s131 = ssub.s32 128, 128
      %132 = vsyncadd [#allocation3], %s131
      %s134 = sshll.u32 [#allocation2], 4
      %s135 = int_to_ptr.vmem [resolvable:$true] %s134
      %137 = dma.vmem_to_hbm [thread:$0]  %s135, 128, %s3, [#allocation3]
    $region29: #{tpu_custom_call.1} parent=1 // pred_fallthru
      _
    // Predicated region
    $region30: #{tpu_custom_call.1} parent=1 // pred_check
      _
    $region31: #{tpu_custom_call.1} parent=1 // pred_check_branch
      %139 = sbr.rel (0) target = $region33
    $region32: #{tpu_custom_call.1} parent=1 // pred_region
      %140 = dma.done [#allocation3], 128
    $region33: #{tpu_custom_call.1} parent=1 // pred_fallthru
      _
    %141 = vsyncpa [#allocation3], 1

</llo_original>
